<compile_context>
chip_gen: v5e
topology: v5e:2x2
jax: 0.10.0
libtpu: 0.0.40
codegen_flags: <defaults>
</compile_context>

<pallas_src>
import functools
import math

import numpy as np
import jax
import jax.numpy as jnp
from jax.experimental import pallas as pl
from jax.experimental.pallas import tpu as pltpu


# ----------------------------------------------------------------------------
# Pallas kernel: one group of Nb images per grid step, activations (C, Nb*H*W).
# expand 1x1 -> +bias -> ReLU6 -> depthwise 3x3 -> +bias -> ReLU6 ->
# project 1x1 -> +bias -> (+ shortcut)
# ----------------------------------------------------------------------------
def _inverted_residual_kernel(*refs, stride, expand_ratio, use_shortcut,
                              width, matmul_dtype):
    it = iter(refs)
    x_ref = next(it)
    if expand_ratio != 1:
        w1_ref, b1_ref = next(it), next(it)
    mw_ref, b2_ref = next(it), next(it)
    sel_ref = next(it) if stride > 1 else None
    w3_ref, b3_ref, out_ref = next(it), next(it), next(it)

    x = x_ref[...].astype(jnp.float32)                 # (Cin, L) lane-dense
    L = x.shape[1]

    # ---- expand: 1x1 conv (BN scale folded into w1) + bias + ReLU6 ----------
    if expand_ratio != 1:
        h = jnp.dot(w1_ref[...], x.astype(matmul_dtype),
                    preferred_element_type=jnp.float32)
        h = jnp.clip(h + b1_ref[...], 0.0, 6.0)        # (Chid, L)
    else:
        h = x

    # ---- depthwise 3x3 conv, padding=1 --------------------------------------
    # Shifted taps via XLU lane rolls; per-tap weights already carry the BN
    # scale AND the 0/1 border mask (handles zero padding, roll wrap-around,
    # and cross-image leakage when batches are folded into the lane axis).
    acc = h * mw_ref[4]                                # center tap: no shift
    for k in range(9):
        if k == 4:
            continue
        di, dj = divmod(k, 3)
        off = (di - 1) * width + (dj - 1)              # source = output + off
        shifted = pltpu.roll(h, shift=(-off) % L, axis=1)
        acc = acc + shifted * mw_ref[k]                # 2 VALU ops per tap

    if stride > 1:
        # Down-sample to the strided output grid with a block-diag 0/1 matmul.
        acc = jnp.dot(acc.astype(matmul_dtype), sel_ref[...],
                      preferred_element_type=jnp.float32)

    h2 = jnp.clip(acc + b2_ref[...], 0.0, 6.0)         # (Chid, Lo)

    # ---- project: 1x1 conv (BN scale folded into w3) + bias -----------------
    y = jnp.dot(w3_ref[...], h2.astype(matmul_dtype),
                preferred_element_type=jnp.float32)
    y = y + b3_ref[...]                                # (Cout, Lo)

    if use_shortcut:
        y = y + x

    out_ref[...] = y.astype(out_ref.dtype)             # lane-dense store


# ----------------------------------------------------------------------------
# Host-side helpers (static numpy, computed once per shape/config)
# ----------------------------------------------------------------------------
def _tap_masks(H, W):
    """0/1 mask per 3x3 tap over output positions whose shifted source pixel
    lies inside the un-padded image (covers border zero-padding, roll
    wrap-around, and cross-image leakage under batch folding)."""
    i = np.arange(H)[:, None]
    j = np.arange(W)[None, :]
    masks = np.zeros((9, H * W), np.float32)
    for di in range(3):
        for dj in range(3):
            valid = ((i + di - 1 >= 0) & (i + di - 1 < H) &
                     (j + dj - 1 >= 0) & (j + dj - 1 < W))
            masks[di * 3 + dj] = valid.reshape(-1).astype(np.float32)
    return masks


def _stride_select(H, W, stride):
    """(H*W, Ho*Wo) 0/1 selection matrix: keep every `stride`-th row/col."""
    Ho = (H - 1) // stride + 1
    Wo = (W - 1) // stride + 1
    sel = np.zeros((H * W, Ho * Wo), np.float32)
    for io in range(Ho):
        for jo in range(Wo):
            sel[(io * stride) * W + jo * stride, io * Wo + jo] = 1.0
    return sel


# ----------------------------------------------------------------------------
# Wrapper: NCHW in / NCHW out (PyTorch-compatible).
# ----------------------------------------------------------------------------
def inverted_residual(x_nchw, params, *, stride, expand_ratio, eps=1e-5,
                      images_per_block=None, matmul_dtype=jnp.bfloat16,
                      out_dtype=None):
    N, Cin, H, W = x_nchw.shape
    HW = H * W
    Ho = (H - 1) // stride + 1
    Wo = (W - 1) // stride + 1
    HWo = Ho * Wo
    Cout = params["w3"].shape[0]
    Chid = params["dw"].shape[0]
    use_shortcut = (stride == 1) and (Cin == Cout)
    out_dtype = x_nchw.dtype if out_dtype is None else out_dtype

    # --- batch folding: Nb images per grid step, grid kept >= 2 when possible
    if images_per_block is None:
        images_per_block = max(1, N // 2)
    Nb = math.gcd(N, max(1, int(images_per_block)))
    G = N // Nb
    L = Nb * HW            # matmul lane extent (multiple of 256 for 16x16 imgs)
    Lo = Nb * HWo          # output lane extent

    def fold(stats):
        gamma, beta, mean, var = stats
        scale = gamma / jnp.sqrt(var + eps)
        return scale, beta - mean * scale

    # x: (N, Cin, H, W) -> (G, Cin, Nb*H*W)  (channel-major, images in lanes)
    x_flat = jnp.transpose(x_nchw.reshape(G, Nb, Cin, HW),
                           (0, 2, 1, 3)).reshape(G, Cin, L)

    args = [x_flat]
    in_specs = [pl.BlockSpec((None, Cin, L), lambda g: (g, 0, 0))]

    def add_const(arr):
        args.append(arr)
        in_specs.append(
            pl.BlockSpec(arr.shape, lambda g, _nd=arr.ndim: (0,) * _nd))

    # Fold BN scales into conv weights host-side; only biases go in-kernel.
    if expand_ratio != 1:
        s1, b1 = fold(params["bn1"])
        add_const((params["w1"] * s1[:, None]).astype(matmul_dtype))   # (Chid,Cin)
        add_const(b1[:, None].astype(jnp.float32))                     # (Chid,1)

    s2, b2 = fold(params["bn2"])
    dw = (params["dw"] * s2[:, None, None]).reshape(Chid, 9)           # (Chid,9)
    masks = jnp.asarray(_tap_masks(H, W))                              # (9,HW)
    mw = dw.T[:, :, None] * masks[:, None, :]                          # (9,Chid,HW)
    mw = jnp.tile(mw, (1, 1, Nb))                                      # (9,Chid,L)
    add_const(mw.astype(jnp.float32))
    add_const(b2[:, None].astype(jnp.float32))                         # (Chid,1)

    if stride > 1:
        sel = _stride_select(H, W, stride)                             # (HW,HWo)
        sel_bd = np.zeros((L, Lo), np.float32)
        for b in range(Nb):
            sel_bd[b * HW:(b + 1) * HW, b * HWo:(b + 1) * HWo] = sel
        add_const(jnp.asarray(sel_bd).astype(matmul_dtype))            # (L,Lo)

    s3, b3 = fold(params["bn3"])
    add_const((params["w3"] * s3[:, None]).astype(matmul_dtype))       # (Cout,Chid)
    add_const(b3[:, None].astype(jnp.float32))                         # (Cout,1)

    kernel = functools.partial(
        _inverted_residual_kernel, stride=stride, expand_ratio=expand_ratio,
        use_shortcut=use_shortcut, width=W, matmul_dtype=matmul_dtype)

    # Advisory cost estimate (includes the stride-select matmul).
    flops = G * (2 * Cin * Chid * L * int(expand_ratio != 1)
                 + 2 * 9 * Chid * L
                 + 2 * Chid * L * Lo * int(stride > 1)
                 + 2 * Chid * Cout * Lo)
    const_bytes = sum(int(np.prod(a.shape)) * a.dtype.itemsize for a in args[1:])
    out_itemsize = np.dtype(out_dtype).itemsize
    bytes_accessed = (x_flat.size * x_flat.dtype.itemsize
                      + G * const_bytes
                      + G * Cout * Lo * out_itemsize)

    # Re-derive the VMEM budget from the actual (double-buffered) block sizes.
    block_bytes = Cin * L * x_flat.dtype.itemsize + Cout * Lo * out_itemsize
    vmem_limit = int(min(max(4 * (block_bytes + const_bytes) + (2 << 20),
                             8 << 20),
                         32 << 20))

    out = pl.pallas_call(
        kernel,
        grid=(G,),
        in_specs=in_specs,
        out_specs=pl.BlockSpec((None, Cout, Lo), lambda g: (g, 0, 0)),
        out_shape=jax.ShapeDtypeStruct((G, Cout, Lo), out_dtype),
        compiler_params=pltpu.CompilerParams(
            dimension_semantics=("parallel",),   # groups split across TCs (v7x)
            vmem_limit_bytes=vmem_limit),
        cost_estimate=pl.CostEstimate(
            flops=int(flops), transcendentals=0,
            bytes_accessed=int(bytes_accessed)),
    )(*args)

    # (G, Cout, Nb*HWo) -> (N, Cout, Ho, Wo)
    out = jnp.transpose(out.reshape(G, Cout, Nb, Ho, Wo),
                        (0, 2, 1, 3, 4)).reshape(N, Cout, Ho, Wo)
    return out


# ----------------------------------------------------------------------------
# Deterministic parameter construction (raw conv weights + BN statistics)
# ----------------------------------------------------------------------------
def make_params(key, in_channel, out_channel, expand_ratio):
    hidden = in_channel * expand_ratio
    ks = jax.random.split(key, 6)

    def bn(k, c):
        kg, kb, km, kv = jax.random.split(k, 4)
        gamma = jax.random.uniform(kg, (c,), jnp.float32, 0.5, 1.5)
        beta = 0.1 * jax.random.normal(kb, (c,), jnp.float32)
        mean = 0.1 * jax.random.normal(km, (c,), jnp.float32)
        var = jax.random.uniform(kv, (c,), jnp.float32, 0.5, 1.5)
        return gamma, beta, mean, var

    return dict(
        w1=0.2 * jax.random.normal(ks[0], (hidden, in_channel), jnp.float32),
        bn1=bn(ks[1], hidden),
        dw=0.2 * jax.random.normal(ks[2], (hidden, 3, 3), jnp.float32),
        bn2=bn(ks[3], hidden),
        w3=0.2 * jax.random.normal(ks[4], (out_channel, hidden), jnp.float32),
        bn3=bn(ks[5], out_channel),
    )


# ----------------------------------------------------------------------------
# Pure-JAX reference (NCHW, BN in inference mode) for validation
# ----------------------------------------------------------------------------
def reference(x, params, *, stride, expand_ratio, eps=1e-5):
    N, Cin, H, W = x.shape
    Cout = params["w3"].shape[0]
    use_shortcut = (stride == 1) and (Cin == Cout)

    def bn(h, stats):
        gamma, beta, mean, var = (s.reshape(1, -1, 1, 1) for s in stats)
        return (h - mean) / jnp.sqrt(var + eps) * gamma + beta

    h = x
    if expand_ratio != 1:
        h = jnp.einsum("oc,nchw->nohw", params["w1"], x)
        h = jnp.clip(bn(h, params["bn1"]), 0.0, 6.0)
    Chid = h.shape[1]

    dwk = params["dw"].reshape(Chid, 1, 3, 3)
    h2 = jax.lax.conv_general_dilated(
        h, dwk, window_strides=(stride, stride), padding=((1, 1), (1, 1)),
        dimension_numbers=("NCHW", "OIHW", "NCHW"), feature_group_count=Chid)
    h2 = jnp.clip(bn(h2, params["bn2"]), 0.0, 6.0)

    y = jnp.einsum("oc,nchw->nohw", params["w3"], h2)
    y = bn(y, params["bn3"])
    if use_shortcut:
        y = y + x
    return y


if __name__ == "__main__":
    key = jax.random.PRNGKey(0)

    # (name, N, in_c, out_c, stride, expand, imgs/block, matmul dtype, rtol, atol)
    configs = [
        # exact-parity path (f32 matmuls), shortcut used, grid=2 (both v7x TCs)
        ("f32_s1_e2_shortcut",   2, 4, 4, 1, 2, 1, jnp.float32,  1e-4, 1e-4),
        # batch folding into the lane axis (Nb=2 -> L=512), bf16 MXU path
        ("bf16_s1_e2_batchfold", 4, 4, 4, 1, 2, 2, jnp.bfloat16, 3e-2, 3e-2),
        # stride-2 path: block-diag select, 128-lane output blocks
        ("bf16_s2_e2",           4, 4, 8, 2, 2, 2, jnp.bfloat16, 3e-2, 3e-2),
        # expand_ratio == 1 path (no expand conv), no shortcut
        ("bf16_s1_e1",           2, 4, 6, 1, 1, 2, jnp.bfloat16, 3e-2, 3e-2),
    ]

    for (name, N, cin, cout, stride, expand, nb, mdt, rtol, atol) in configs:
        kx, kp, key = jax.random.split(key, 3)
        x = jax.random.normal(kx, (N, cin, 16, 16), jnp.float32)  # NCHW
        params = make_params(kp, cin, cout, expand)

        out = jax.block_until_ready(
            inverted_residual(x, params, stride=stride, expand_ratio=expand,
                              images_per_block=nb, matmul_dtype=mdt))
        ref = jax.block_until_ready(
            reference(x, params, stride=stride, expand_ratio=expand))

        np.testing.assert_allclose(np.asarray(out), np.asarray(ref),
                                   rtol=rtol, atol=atol,
                                   err_msg=f"mismatch in config {name}")

    print("KERNEL_OK")
</pallas_src>

<mosaic_0001>
module attributes {stable_mosaic.version = 11 : i64} {
  func.func @_inverted_residual_kernel(%arg0: i32, %arg1: memref<1x4x256xf32, #tpu.memory_space<vmem>>, %arg2: memref<8x4xf32, #tpu.memory_space<vmem>>, %arg3: memref<8x1xf32, #tpu.memory_space<vmem>>, %arg4: memref<9x8x256xf32, #tpu.memory_space<vmem>>, %arg5: memref<8x1xf32, #tpu.memory_space<vmem>>, %arg6: memref<4x8xf32, #tpu.memory_space<vmem>>, %arg7: memref<4x1xf32, #tpu.memory_space<vmem>>, %arg8: memref<1x4x256xf32, #tpu.memory_space<vmem>>) attributes {dimension_semantics = [#tpu.dimension_semantics<parallel>], iteration_bounds = array<i64: 2>, scalar_prefetch = 0 : i64, scratch_operands = 0 : i64, tpu.core_type = #tpu.core_type<tc>, window_params = [{transform_indices = @transform_0, window_bounds = array<i64: 1, 4, 256>}, {pipeline_mode = #tpu.pipeline_mode<synchronous>, transform_indices = @transform_1, window_bounds = array<i64: 8, 4>}, {pipeline_mode = #tpu.pipeline_mode<synchronous>, transform_indices = @transform_2, window_bounds = array<i64: 8, 1>}, {pipeline_mode = #tpu.pipeline_mode<synchronous>, transform_indices = @transform_3, window_bounds = array<i64: 9, 8, 256>}, {pipeline_mode = #tpu.pipeline_mode<synchronous>, transform_indices = @transform_4, window_bounds = array<i64: 8, 1>}, {pipeline_mode = #tpu.pipeline_mode<synchronous>, transform_indices = @transform_5, window_bounds = array<i64: 4, 8>}, {pipeline_mode = #tpu.pipeline_mode<synchronous>, transform_indices = @transform_6, window_bounds = array<i64: 4, 1>}, {transform_indices = @transform_7, window_bounds = array<i64: 1, 4, 256>}]} {
    %c0 = arith.constant 0 : index
    %c0_0 = arith.constant 0 : index
    %c0_1 = arith.constant 0 : index
    %0 = vector.load %arg1[%c0, %c0_0, %c0_1] : memref<1x4x256xf32, #tpu.memory_space<vmem>>, vector<1x4x256xf32>
    %1 = vector.shape_cast %0 : vector<1x4x256xf32> to vector<4x256xf32>
    %c0_2 = arith.constant 0 : index
    %c0_3 = arith.constant 0 : index
    %2 = vector.load %arg2[%c0_2, %c0_3] : memref<8x4xf32, #tpu.memory_space<vmem>>, vector<8x4xf32>
    %cst = arith.constant dense<0.000000e+00> : vector<8x256xf32>
    %3 = tpu.matmul %2, %1, %cst {dimension_numbers = #tpu.dot_dimension_numbers<[1], [0], [0], [1], [0, 0, 1, 1], [], []>} : vector<8x4xf32>, vector<4x256xf32>, vector<8x256xf32> -> vector<8x256xf32>
    %c0_4 = arith.constant 0 : index
    %c0_5 = arith.constant 0 : index
    %4 = vector.load %arg3[%c0_4, %c0_5] : memref<8x1xf32, #tpu.memory_space<vmem>>, vector<8x1xf32>
    %5 = vector.broadcast %4 : vector<8x1xf32> to vector<8x256xf32>
    %6 = arith.addf %3, %5 : vector<8x256xf32>
    %cst_6 = arith.constant 0.000000e+00 : f32
    %cst_7 = arith.constant 6.000000e+00 : f32
    %7 = vector.broadcast %cst_6 : f32 to vector<8x256xf32>
    %8 = arith.maximumf %7, %6 : vector<8x256xf32>
    %9 = vector.broadcast %cst_7 : f32 to vector<8x256xf32>
    %10 = arith.minimumf %9, %8 : vector<8x256xf32>
    %c4 = arith.constant 4 : index
    %c0_8 = arith.constant 0 : index
    %c0_9 = arith.constant 0 : index
    %11 = vector.load %arg4[%c4, %c0_8, %c0_9] : memref<9x8x256xf32, #tpu.memory_space<vmem>>, vector<1x8x256xf32>
    %12 = vector.shape_cast %11 : vector<1x8x256xf32> to vector<8x256xf32>
    %13 = arith.mulf %10, %12 : vector<8x256xf32>
    %c17_i32 = arith.constant 17 : i32
    %14 = tpu.dynamic_rotate %10 by %c17_i32 dim 1 : vector<8x256xf32>, i32 -> vector<8x256xf32>
    %c0_10 = arith.constant 0 : index
    %c0_11 = arith.constant 0 : index
    %c0_12 = arith.constant 0 : index
    %15 = vector.load %arg4[%c0_10, %c0_11, %c0_12] : memref<9x8x256xf32, #tpu.memory_space<vmem>>, vector<1x8x256xf32>
    %16 = vector.shape_cast %15 : vector<1x8x256xf32> to vector<8x256xf32>
    %17 = arith.mulf %14, %16 : vector<8x256xf32>
    %18 = arith.addf %13, %17 : vector<8x256xf32>
    %c16_i32 = arith.constant 16 : i32
    %19 = tpu.dynamic_rotate %10 by %c16_i32 dim 1 : vector<8x256xf32>, i32 -> vector<8x256xf32>
    %c1 = arith.constant 1 : index
    %c0_13 = arith.constant 0 : index
    %c0_14 = arith.constant 0 : index
    %20 = vector.load %arg4[%c1, %c0_13, %c0_14] : memref<9x8x256xf32, #tpu.memory_space<vmem>>, vector<1x8x256xf32>
    %21 = vector.shape_cast %20 : vector<1x8x256xf32> to vector<8x256xf32>
    %22 = arith.mulf %19, %21 : vector<8x256xf32>
    %23 = arith.addf %18, %22 : vector<8x256xf32>
    %c15_i32 = arith.constant 15 : i32
    %24 = tpu.dynamic_rotate %10 by %c15_i32 dim 1 : vector<8x256xf32>, i32 -> vector<8x256xf32>
    %c2 = arith.constant 2 : index
    %c0_15 = arith.constant 0 : index
    %c0_16 = arith.constant 0 : index
    %25 = vector.load %arg4[%c2, %c0_15, %c0_16] : memref<9x8x256xf32, #tpu.memory_space<vmem>>, vector<1x8x256xf32>
    %26 = vector.shape_cast %25 : vector<1x8x256xf32> to vector<8x256xf32>
    %27 = arith.mulf %24, %26 : vector<8x256xf32>
    %28 = arith.addf %23, %27 : vector<8x256xf32>
    %c1_i32 = arith.constant 1 : i32
    %29 = tpu.dynamic_rotate %10 by %c1_i32 dim 1 : vector<8x256xf32>, i32 -> vector<8x256xf32>
    %c3 = arith.constant 3 : index
    %c0_17 = arith.constant 0 : index
    %c0_18 = arith.constant 0 : index
    %30 = vector.load %arg4[%c3, %c0_17, %c0_18] : memref<9x8x256xf32, #tpu.memory_space<vmem>>, vector<1x8x256xf32>
    %31 = vector.shape_cast %30 : vector<1x8x256xf32> to vector<8x256xf32>
    %32 = arith.mulf %29, %31 : vector<8x256xf32>
    %33 = arith.addf %28, %32 : vector<8x256xf32>
    %c255_i32 = arith.constant 255 : i32
    %34 = tpu.dynamic_rotate %10 by %c255_i32 dim 1 : vector<8x256xf32>, i32 -> vector<8x256xf32>
    %c5 = arith.constant 5 : index
    %c0_19 = arith.constant 0 : index
    %c0_20 = arith.constant 0 : index
    %35 = vector.load %arg4[%c5, %c0_19, %c0_20] : memref<9x8x256xf32, #tpu.memory_space<vmem>>, vector<1x8x256xf32>
    %36 = vector.shape_cast %35 : vector<1x8x256xf32> to vector<8x256xf32>
    %37 = arith.mulf %34, %36 : vector<8x256xf32>
    %38 = arith.addf %33, %37 : vector<8x256xf32>
    %c241_i32 = arith.constant 241 : i32
    %39 = tpu.dynamic_rotate %10 by %c241_i32 dim 1 : vector<8x256xf32>, i32 -> vector<8x256xf32>
    %c6 = arith.constant 6 : index
    %c0_21 = arith.constant 0 : index
    %c0_22 = arith.constant 0 : index
    %40 = vector.load %arg4[%c6, %c0_21, %c0_22] : memref<9x8x256xf32, #tpu.memory_space<vmem>>, vector<1x8x256xf32>
    %41 = vector.shape_cast %40 : vector<1x8x256xf32> to vector<8x256xf32>
    %42 = arith.mulf %39, %41 : vector<8x256xf32>
    %43 = arith.addf %38, %42 : vector<8x256xf32>
    %c240_i32 = arith.constant 240 : i32
    %44 = tpu.dynamic_rotate %10 by %c240_i32 dim 1 : vector<8x256xf32>, i32 -> vector<8x256xf32>
    %c7 = arith.constant 7 : index
    %c0_23 = arith.constant 0 : index
    %c0_24 = arith.constant 0 : index
    %45 = vector.load %arg4[%c7, %c0_23, %c0_24] : memref<9x8x256xf32, #tpu.memory_space<vmem>>, vector<1x8x256xf32>
    %46 = vector.shape_cast %45 : vector<1x8x256xf32> to vector<8x256xf32>
    %47 = arith.mulf %44, %46 : vector<8x256xf32>
    %48 = arith.addf %43, %47 : vector<8x256xf32>
    %c239_i32 = arith.constant 239 : i32
    %49 = tpu.dynamic_rotate %10 by %c239_i32 dim 1 : vector<8x256xf32>, i32 -> vector<8x256xf32>
    %c8 = arith.constant 8 : index
    %c0_25 = arith.constant 0 : index
    %c0_26 = arith.constant 0 : index
    %50 = vector.load %arg4[%c8, %c0_25, %c0_26] : memref<9x8x256xf32, #tpu.memory_space<vmem>>, vector<1x8x256xf32>
    %51 = vector.shape_cast %50 : vector<1x8x256xf32> to vector<8x256xf32>
    %52 = arith.mulf %49, %51 : vector<8x256xf32>
    %53 = arith.addf %48, %52 : vector<8x256xf32>
    %c0_27 = arith.constant 0 : index
    %c0_28 = arith.constant 0 : index
    %54 = vector.load %arg5[%c0_27, %c0_28] : memref<8x1xf32, #tpu.memory_space<vmem>>, vector<8x1xf32>
    %55 = vector.broadcast %54 : vector<8x1xf32> to vector<8x256xf32>
    %56 = arith.addf %53, %55 : vector<8x256xf32>
    %cst_29 = arith.constant 0.000000e+00 : f32
    %cst_30 = arith.constant 6.000000e+00 : f32
    %57 = vector.broadcast %cst_29 : f32 to vector<8x256xf32>
    %58 = arith.maximumf %57, %56 : vector<8x256xf32>
    %59 = vector.broadcast %cst_30 : f32 to vector<8x256xf32>
    %60 = arith.minimumf %59, %58 : vector<8x256xf32>
    %c0_31 = arith.constant 0 : index
    %c0_32 = arith.constant 0 : index
    %61 = vector.load %arg6[%c0_31, %c0_32] : memref<4x8xf32, #tpu.memory_space<vmem>>, vector<4x8xf32>
    %cst_33 = arith.constant dense<0.000000e+00> : vector<4x256xf32>
    %62 = tpu.matmul %61, %60, %cst_33 {dimension_numbers = #tpu.dot_dimension_numbers<[1], [0], [0], [1], [0, 0, 1, 1], [], []>} : vector<4x8xf32>, vector<8x256xf32>, vector<4x256xf32> -> vector<4x256xf32>
    %c0_34 = arith.constant 0 : index
    %c0_35 = arith.constant 0 : index
    %63 = vector.load %arg7[%c0_34, %c0_35] : memref<4x1xf32, #tpu.memory_space<vmem>>, vector<4x1xf32>
    %64 = vector.broadcast %63 : vector<4x1xf32> to vector<4x256xf32>
    %65 = arith.addf %62, %64 : vector<4x256xf32>
    %66 = arith.addf %65, %1 : vector<4x256xf32>
    %c0_36 = arith.constant 0 : index
    %c0_37 = arith.constant 0 : index
    %c0_38 = arith.constant 0 : index
    %67 = vector.load %arg8[%c0_36, %c0_37, %c0_38] : memref<1x4x256xf32, #tpu.memory_space<vmem>>, vector<1x4x256xf32>
    %68 = vector.shape_cast %67 : vector<1x4x256xf32> to vector<4x256xf32>
    %69 = vector.shape_cast %66 : vector<4x256xf32> to vector<1x4x256xf32>
    tpu.vector_store %arg8[%c0_36, %c0_37, %c0_38], %69 {strides = array<i32>} : memref<1x4x256xf32, #tpu.memory_space<vmem>>, vector<1x4x256xf32>,
    return
  }
  func.func @transform_0(%arg0: i32) -> (i32, i32, i32) {
    %c0_i32 = arith.constant 0 : i32
    %c0_i32_0 = arith.constant 0 : i32
    %c0_i32_1 = arith.constant 0 : i32
    return %arg0, %c0_i32, %c0_i32_0 : i32, i32, i32
  }
  func.func @transform_1(%arg0: i32) -> (i32, i32) {
    %c0_i32 = arith.constant 0 : i32
    %c0_i32_0 = arith.constant 0 : i32
    %c0_i32_1 = arith.constant 0 : i32
    return %c0_i32, %c0_i32_0 : i32, i32
  }
  func.func @transform_2(%arg0: i32) -> (i32, i32) {
    %c0_i32 = arith.constant 0 : i32
    %c0_i32_0 = arith.constant 0 : i32
    %c0_i32_1 = arith.constant 0 : i32
    return %c0_i32, %c0_i32_0 : i32, i32
  }
  func.func @transform_3(%arg0: i32) -> (i32, i32, i32) {
    %c0_i32 = arith.constant 0 : i32
    %c0_i32_0 = arith.constant 0 : i32
    %c0_i32_1 = arith.constant 0 : i32
    %c0_i32_2 = arith.constant 0 : i32
    return %c0_i32, %c0_i32_0, %c0_i32_1 : i32, i32, i32
  }
  func.func @transform_4(%arg0: i32) -> (i32, i32) {
    %c0_i32 = arith.constant 0 : i32
    %c0_i32_0 = arith.constant 0 : i32
    %c0_i32_1 = arith.constant 0 : i32
    return %c0_i32, %c0_i32_0 : i32, i32
  }
  func.func @transform_5(%arg0: i32) -> (i32, i32) {
    %c0_i32 = arith.constant 0 : i32
    %c0_i32_0 = arith.constant 0 : i32
    %c0_i32_1 = arith.constant 0 : i32
    return %c0_i32, %c0_i32_0 : i32, i32
  }
  func.func @transform_6(%arg0: i32) -> (i32, i32) {
    %c0_i32 = arith.constant 0 : i32
    %c0_i32_0 = arith.constant 0 : i32
    %c0_i32_1 = arith.constant 0 : i32
    return %c0_i32, %c0_i32_0 : i32, i32
  }
  func.func @transform_7(%arg0: i32) -> (i32, i32, i32) {
    %c0_i32 = arith.constant 0 : i32
    %c0_i32_0 = arith.constant 0 : i32
    %c0_i32_1 = arith.constant 0 : i32
    return %arg0, %c0_i32, %c0_i32_0 : i32, i32, i32
  }
}

</mosaic_0001>

<llo_original>
// kernel: tpu_custom_call.1
$region0: #{tpu_custom_call.1}
  #allocation0 [shape = 'u32[]', space=smem, size = 0x4, offset = 0x4, fixed_abs, tag = 'smem constant byte address 0x4 - core index']
  #allocation1 [shape = 'u32[72,128]{1,0:T(1,128)}', space=vmem, size = 0x9000, scoped, tag = 'internal scratch']
  %s0 = inlined_call_operand.vmem [shape: f32[2,4,256], index: 0, kind: input, shape index: {}]
  %s1 = inlined_call_operand.vmem [shape: f32[8,4], index: 1, kind: input, shape index: {}]
  %s2 = inlined_call_operand.vmem [shape: f32[8,1], index: 2, kind: input, shape index: {}]
  %s3 = inlined_call_operand.hbm [shape: f32[9,8,256], index: 3, kind: input, shape index: {}]
  %s4 = inlined_call_operand.vmem [shape: f32[8,1], index: 4, kind: input, shape index: {}]
  %s5 = inlined_call_operand.vmem [shape: f32[4,8], index: 5, kind: input, shape index: {}]
  %s6 = inlined_call_operand.vmem [shape: f32[4,1], index: 6, kind: input, shape index: {}]
  %s7 = inlined_call_operand.hbm [shape: f32[2,4,256], index: 7, kind: output, shape index: {}]
  %s8 = sld [smem:[#allocation0]]
  $region65: #{tpu_custom_call.1} parent=0
    _
  %s10 = ssub.s32 1, %s8
  %s11 = scalar_select 0, %s10, %s8
  $region1: #{tpu_custom_call.1} parent=0
    #allocation2 [shape = 'u8[73728]{0}', space=vmem, size = 0x12000, scoped, tag = 'input window, operand 3, single buffered']
    #allocation3 [shape = 's32[2]{0}', space=sflag, size = 0x8, scoped, tag = 'scoped memory for tpu_custom_call.1']
    #allocation4 [shape = 's32[2]{0}', space=sflag, size = 0x8, scoped, tag = 'scoped memory for tpu_custom_call.1']
    #allocation5 [shape = 'u8[8192]{0}', space=vmem, size = 0x2000, scoped, tag = 'output window, operand 0']
    %12 = vsyncpa [#allocation3], 0
    %13 = vsyncpa [#allocation4], 0
    %s14 = scalar_lea.sflag [#allocation4], 1
    %15 = vsyncpa %s14, 0
    loop: start=0, step=1, limit=4
    $region2: #{tpu_custom_call.1} parent=1 // loop_pre_header
      _
    $region3: #{tpu_custom_call.1} parent=1 // loop_header
      %s17 = sphi 0, %s21
      %p18 = scmp.ge.s32.totalorder %s17, 4
      %s27 = sphi 0, %s29
      %s30 = sphi 0, %s27
      %s31 = sphi 0, %s30
      %s47 = sphi 0, %s31
      %s51 = sphi 0, %s51
      %s53 = sphi 0, %s51
      %s54 = sphi 0, %s53
      %s68 = sphi 0, %s54
      %s72 = sphi 0, %s72
      %s74 = sphi 0, %s72
      %s75 = sphi 0, %s74
      %s89 = sphi 0, %s75
      %s93 = sphi 0, %s93
      %s95 = sphi 0, %s93
      %s96 = sphi 0, %s95
      %s110 = sphi 0, %s96
      %s114 = sphi 0, %s114
      %s116 = sphi 0, %s114
      %s117 = sphi 0, %s116
      %s131 = sphi 0, %s117
      %s135 = sphi 0, %s135
      %s137 = sphi 0, %s135
      %s138 = sphi 0, %s137
      %s152 = sphi 0, %s138
      %s156 = sphi 0, %s156
      %s158 = sphi 0, %s156
      %s159 = sphi 0, %s158
      %s173 = sphi 0, %s159
      %s179 = sphi 0, %s181
      %s182 = sphi 0, %s179
      %s183 = sphi 0, %s182
      %s199 = sphi 0, %s183
    $region4: #{tpu_custom_call.1} parent=1 // loop_header_branch
      %20 = sbr.rel (%p18) target = $region8
    $region5: #{tpu_custom_call.1} parent=1 // loop_body
      %s22 = ssub.s32 %s17, 1
      %s23 = ssub.s32 %s17, 2
      %s24 = sadd.s32 %s17, 1
      %s25 = ssub.s32 %s17, %s24
      %p26 = scmp.eq.s32.totalorder %s25, 0
      %s28 = sadd.s32 %s27, 1
      %s29 = scalar_select %p26, %s27, %s28
      %p32 = pneg %p26
      %p33 = scmp.eq.s32.totalorder %s17, 1
      %p34 = por %p32, %p33
      %p35 = scmp.ne.s32.totalorder %s27, %s30
      %p36 = scmp.eq.s32.totalorder %s17, 0
      %p37 = por %p35, %p36
      %p38 = scmp.ne.s32.totalorder %s27, %s30
      %p39 = scmp.eq.s32.totalorder %s22, 1
      %p40 = por %p38, %p39
      %p41 = scmp.ne.s32.totalorder %s30, %s31
      %p42 = scmp.eq.s32.totalorder %s22, 0
      %p43 = por %p41, %p42
      %p44 = scmp.ne.s32.totalorder %s30, %s31
      %p45 = scmp.eq.s32.totalorder %s23, 1
      %p46 = por %p44, %p45
      %p48 = scmp.ne.s32.totalorder %s31, %s47
      %p49 = scmp.eq.s32.totalorder %s23, 0
      %p50 = por %p48, %p49
      %s52 = sadd.s32 %s51, 1
      %p55 = scmp.eq.s32.totalorder %s17, 1
      %p56 = scmp.ne.s32.totalorder %s51, %s53
      %p57 = scmp.eq.s32.totalorder %s17, 0
      %p58 = por %p56, %p57
      %p59 = scmp.ne.s32.totalorder %s51, %s53
      %p60 = scmp.eq.s32.totalorder %s22, 1
      %p61 = por %p59, %p60
      %p62 = scmp.ne.s32.totalorder %s53, %s54
      %p63 = scmp.eq.s32.totalorder %s22, 0
      %p64 = por %p62, %p63
      %p65 = scmp.ne.s32.totalorder %s53, %s54
      %p66 = scmp.eq.s32.totalorder %s23, 1
      %p67 = por %p65, %p66
      %p69 = scmp.ne.s32.totalorder %s54, %s68
      %p70 = scmp.eq.s32.totalorder %s23, 0
      %p71 = por %p69, %p70
      %s73 = sadd.s32 %s72, 1
      %p76 = scmp.eq.s32.totalorder %s17, 1
      %p77 = scmp.ne.s32.totalorder %s72, %s74
      %p78 = scmp.eq.s32.totalorder %s17, 0
      %p79 = por %p77, %p78
      %p80 = scmp.ne.s32.totalorder %s72, %s74
      %p81 = scmp.eq.s32.totalorder %s22, 1
      %p82 = por %p80, %p81
      %p83 = scmp.ne.s32.totalorder %s74, %s75
      %p84 = scmp.eq.s32.totalorder %s22, 0
      %p85 = por %p83, %p84
      %p86 = scmp.ne.s32.totalorder %s74, %s75
      %p87 = scmp.eq.s32.totalorder %s23, 1
      %p88 = por %p86, %p87
      %p90 = scmp.ne.s32.totalorder %s75, %s89
      %p91 = scmp.eq.s32.totalorder %s23, 0
      %p92 = por %p90, %p91
      %s94 = sadd.s32 %s93, 1
      %p97 = scmp.eq.s32.totalorder %s17, 1
      %p98 = scmp.ne.s32.totalorder %s93, %s95
      %p99 = scmp.eq.s32.totalorder %s17, 0
      %p100 = por %p98, %p99
      %p101 = scmp.ne.s32.totalorder %s93, %s95
      %p102 = scmp.eq.s32.totalorder %s22, 1
      %p103 = por %p101, %p102
      %p104 = scmp.ne.s32.totalorder %s95, %s96
      %p105 = scmp.eq.s32.totalorder %s22, 0
      %p106 = por %p104, %p105
      %p107 = scmp.ne.s32.totalorder %s95, %s96
      %p108 = scmp.eq.s32.totalorder %s23, 1
      %p109 = por %p107, %p108
      %p111 = scmp.ne.s32.totalorder %s96, %s110
      %p112 = scmp.eq.s32.totalorder %s23, 0
      %p113 = por %p111, %p112
      %s115 = sadd.s32 %s114, 1
      %p118 = scmp.eq.s32.totalorder %s17, 1
      %p119 = scmp.ne.s32.totalorder %s114, %s116
      %p120 = scmp.eq.s32.totalorder %s17, 0
      %p121 = por %p119, %p120
      %p122 = scmp.ne.s32.totalorder %s114, %s116
      %p123 = scmp.eq.s32.totalorder %s22, 1
      %p124 = por %p122, %p123
      %p125 = scmp.ne.s32.totalorder %s116, %s117
      %p126 = scmp.eq.s32.totalorder %s22, 0
      %p127 = por %p125, %p126
      %p128 = scmp.ne.s32.totalorder %s116, %s117
      %p129 = scmp.eq.s32.totalorder %s23, 1
      %p130 = por %p128, %p129
      %p132 = scmp.ne.s32.totalorder %s117, %s131
      %p133 = scmp.eq.s32.totalorder %s23, 0
      %p134 = por %p132, %p133
      %s136 = sadd.s32 %s135, 1
      %p139 = scmp.eq.s32.totalorder %s17, 1
      %p140 = scmp.ne.s32.totalorder %s135, %s137
      %p141 = scmp.eq.s32.totalorder %s17, 0
      %p142 = por %p140, %p141
      %p143 = scmp.ne.s32.totalorder %s135, %s137
      %p144 = scmp.eq.s32.totalorder %s22, 1
      %p145 = por %p143, %p144
      %p146 = scmp.ne.s32.totalorder %s137, %s138
      %p147 = scmp.eq.s32.totalorder %s22, 0
      %p148 = por %p146, %p147
      %p149 = scmp.ne.s32.totalorder %s137, %s138
      %p150 = scmp.eq.s32.totalorder %s23, 1
      %p151 = por %p149, %p150
      %p153 = scmp.ne.s32.totalorder %s138, %s152
      %p154 = scmp.eq.s32.totalorder %s23, 0
      %p155 = por %p153, %p154
      %s157 = sadd.s32 %s156, 1
      %p160 = scmp.eq.s32.totalorder %s17, 1
      %p161 = scmp.ne.s32.totalorder %s156, %s158
      %p162 = scmp.eq.s32.totalorder %s17, 0
      %p163 = por %p161, %p162
      %p164 = scmp.ne.s32.totalorder %s156, %s158
      %p165 = scmp.eq.s32.totalorder %s22, 1
      %p166 = por %p164, %p165
      %p167 = scmp.ne.s32.totalorder %s158, %s159
      %p168 = scmp.eq.s32.totalorder %s22, 0
      %p169 = por %p167, %p168
      %p170 = scmp.ne.s32.totalorder %s158, %s159
      %p171 = scmp.eq.s32.totalorder %s23, 1
      %p172 = por %p170, %p171
      %p174 = scmp.ne.s32.totalorder %s159, %s173
      %p175 = scmp.eq.s32.totalorder %s23, 0
      %p176 = por %p174, %p175
      %s177 = ssub.s32 %s17, %s24
      %p178 = scmp.eq.s32.totalorder %s177, 0
      %s180 = sadd.s32 %s179, 1
      %s181 = scalar_select %p178, %s179, %s180
      %p184 = pneg %p178
      %p185 = scmp.eq.s32.totalorder %s17, 1
      %p186 = por %p184, %p185
      %p187 = scmp.ne.s32.totalorder %s179, %s182
      %p188 = scmp.eq.s32.totalorder %s17, 0
      %p189 = por %p187, %p188
      %p190 = scmp.ne.s32.totalorder %s179, %s182
      %p191 = scmp.eq.s32.totalorder %s22, 1
      %p192 = por %p190, %p191
      %p193 = scmp.ne.s32.totalorder %s182, %s183
      %p194 = scmp.eq.s32.totalorder %s22, 0
      %p195 = por %p193, %p194
      %p196 = scmp.ne.s32.totalorder %s182, %s183
      %p197 = scmp.eq.s32.totalorder %s23, 1
      %p198 = por %p196, %p197
      %p200 = scmp.ne.s32.totalorder %s183, %s199
      %p201 = scmp.eq.s32.totalorder %s23, 0
      %p202 = por %p200, %p201
      %p203 = scmp.le.s32.totalorder 1, %s17
      %p204 = scmp.lt.s32.totalorder %s17, 3
      %p205 = pnand %p203, %p204
      %p206 = pneg %p205
      // Predicated region
      $region9: #{tpu_custom_call.1} parent=5 // pred_check
        _
      $region10: #{tpu_custom_call.1} parent=5 // pred_check_branch
        %208 = sbr.rel (%p205) target = $region12
      $region11: #{tpu_custom_call.1} parent=5 // pred_region
        %s209 = ssub.s32 %s17, 1
        // Predicated region
        $region13: #{tpu_custom_call.1} parent=11 // pred_check
          %p210 = pneg %p64
        $region14: #{tpu_custom_call.1} parent=11 // pred_check_branch
          %212 = sbr.rel (%p210) target = $region16
        $region15: #{tpu_custom_call.1} parent=11 // pred_region
          _
        $region16: #{tpu_custom_call.1} parent=11 // pred_fallthru
          _
        // Predicated region
        $region17: #{tpu_custom_call.1} parent=11 // pred_check
          %p213 = pneg %p85
        $region18: #{tpu_custom_call.1} parent=11 // pred_check_branch
          %215 = sbr.rel (%p213) target = $region20
        $region19: #{tpu_custom_call.1} parent=11 // pred_region
          _
        $region20: #{tpu_custom_call.1} parent=11 // pred_fallthru
          _
        // Predicated region
        $region21: #{tpu_custom_call.1} parent=11 // pred_check
          %p216 = pneg %p106
        $region22: #{tpu_custom_call.1} parent=11 // pred_check_branch
          %218 = sbr.rel (%p216) target = $region24
        $region23: #{tpu_custom_call.1} parent=11 // pred_region
          %220 = vsyncadd [#allocation3], 0
          %s221 = sshll.u32 %s3, 4
          %s222 = int_to_ptr.hbm [resolvable:$true] %s221
          %s223 = sshll.u32 [#allocation2], 4
          %s224 = int_to_ptr.vmem [resolvable:$true] %s223
          %229 = dma.hbm_to_vmem [thread:$0]  %s222, 2304, %s224, [#allocation3], 256, 256, 16
        $region24: #{tpu_custom_call.1} parent=11 // pred_fallthru
          _
        // Predicated region
        $region25: #{tpu_custom_call.1} parent=11 // pred_check
          %p230 = pneg %p127
        $region26: #{tpu_custom_call.1} parent=11 // pred_check_branch
          %232 = sbr.rel (%p230) target = $region28
        $region27: #{tpu_custom_call.1} parent=11 // pred_region
          _
        $region28: #{tpu_custom_call.1} parent=11 // pred_fallthru
          _
        // Predicated region
        $region29: #{tpu_custom_call.1} parent=11 // pred_check
          %p233 = pneg %p148
        $region30: #{tpu_custom_call.1} parent=11 // pred_check_branch
          %235 = sbr.rel (%p233) target = $region32
        $region31: #{tpu_custom_call.1} parent=11 // pred_region
          _
        $region32: #{tpu_custom_call.1} parent=11 // pred_fallthru
          _
        // Predicated region
        $region33: #{tpu_custom_call.1} parent=11 // pred_check
          %p236 = pneg %p169
        $region34: #{tpu_custom_call.1} parent=11 // pred_check_branch
          %238 = sbr.rel (%p236) target = $region36
        $region35: #{tpu_custom_call.1} parent=11 // pred_region
          _
        $region36: #{tpu_custom_call.1} parent=11 // pred_fallthru
          _
      $region12: #{tpu_custom_call.1} parent=5 // pred_fallthru
        _
      %p239 = scmp.lt.s32.totalorder %s17, 2
      // Predicated region
      $region37: #{tpu_custom_call.1} parent=5 // pred_check
        %p240 = pneg %p239
      $region38: #{tpu_custom_call.1} parent=5 // pred_check_branch
        %242 = sbr.rel (%p240) target = $region40
      $region39: #{tpu_custom_call.1} parent=5 // pred_region
        // Predicated region
        $region41: #{tpu_custom_call.1} parent=39 // pred_check
          %p243 = pneg %p37
        $region42: #{tpu_custom_call.1} parent=39 // pred_check_branch
          %245 = sbr.rel (%p243) target = $region44
        $region43: #{tpu_custom_call.1} parent=39 // pred_region
          %p246 = scmp.lt.s32.totalorder %s17, 1
          %s247 = scalar_select %p246, %s17, 1
          %s248 = smul.addr %s247, 2
          %s249 = smul.addr %s248, 4
          %s250 = scalar_lea.vmem %s0, %s249
        $region44: #{tpu_custom_call.1} parent=39 // pred_fallthru
          _
      $region40: #{tpu_custom_call.1} parent=5 // pred_fallthru
        _
      %p251 = scmp.le.s32.totalorder 1, %s17
      %p252 = scmp.lt.s32.totalorder %s17, 3
      %p253 = pnand %p251, %p252
      %p254 = pneg %p253
      // Predicated region
      $region45: #{tpu_custom_call.1} parent=5 // pred_check
        _
      $region46: #{tpu_custom_call.1} parent=5 // pred_check_branch
        %256 = sbr.rel (%p253) target = $region48
      $region47: #{tpu_custom_call.1} parent=5 // pred_region
        %s257 = ssub.s32 %s17, 1
        // Predicated region
        $region49: #{tpu_custom_call.1} parent=47 // pred_check
          %p258 = pneg %p106
        $region50: #{tpu_custom_call.1} parent=47 // pred_check_branch
          %260 = sbr.rel (%p258) target = $region52
        $region51: #{tpu_custom_call.1} parent=47 // pred_region
          %262 = dma.done [#allocation3], 2304
        $region52: #{tpu_custom_call.1} parent=47 // pred_fallthru
          _
        %p263 = scmp.lt.s32.totalorder %s22, 1
        %s264 = scalar_select %p263, %s22, 1
        %s265 = smul.addr %s264, 2
        %s266 = smul.addr %s265, 4
        %s267 = scalar_lea.vmem %s0, %s266
        %p268 = pneg %p43
        %p269 = pneg %p40
        %p270 = pneg %p64
        %p271 = pneg %p61
        %p272 = pneg %p85
        %p273 = pneg %p82
        %p274 = pneg %p106
        %p275 = pneg %p103
        %p276 = pneg %p127
        %p277 = pneg %p124
        %p278 = pneg %p148
        %p279 = pneg %p145
        %p280 = pneg %p169
        %p281 = pneg %p166
        %p282 = pneg %p195
        %p283 = pneg %p192
        %s284 = sand.u32 %s182, 1
        %s285 = scalar_lea.sflag [#allocation4], %s284
        %s286 = sand.u32 %s182, 1
        %s287 = smul.addr %s286, 8
        %s288 = scalar_lea.vmem [#allocation5], %s287
        %p289 = scmp.lt.s32.totalorder %s22, 1
        %s290 = scalar_select %p289, %s22, 1
        %s291 = smul.addr %s290, 2
        %s292 = smul.addr %s291, 4
        %s293 = scalar_lea.vmem %s0, %s292
        %v294 = vld [vmem:[%s293] sm:$0xff]
        %v295 = vld [vmem:[%s1] sm:$0xff]
        %v296 = vld [vmem:[%s2] sm:$0xff]
        %298 = vset.pattern.permute.xlu0 0
        %299 = vperm.xlu0 %298, %v296
        %v300 = vpop.permute.xlu0 %299
        %303 = vst [vmem:[#allocation1] ss:$2 sm:$0xff] %v294
        %v304 = vld.sshfl [vmem:[#allocation1] sm:$0xff pattern:$0x75316420]
        %v305 = vld.sshfl [vmem:[#allocation1 + $0x8] sm:$0xff pattern:$0x75316420]
        %vm306 = vcmask 31744
        %v308 = vsel %vm306, %v295, 0
        %vm310 = vcmask 1043456
        %v311 = vsel %vm310, %v304, 0
        %v313 = vsel %vm310, %v305, 0
        %315 = vmatpush.msra.mxu0 0.0
        %316 = vmatpush.msra.mxu0 0.0
        %317 = vmatpush.msra.mxu0 0.0
        %318 = vmatpush.msra.mxu0 0.0
        %319 = vmatpush.msra.mxu0 0.0
        %320 = vmatpush.msra.mxu0 0.0
        %321 = vmatpush.msra.mxu0 0.0
        %322 = vmatpush.msra.mxu0 0.0
        %323 = vmatpush.msra.mxu0 0.0
        %324 = vmatpush.msra.mxu0 0.0
        %325 = vmatpush.msra.mxu0 0.0
        %326 = vmatpush.msra.mxu0 0.0
        %327 = vmatpush.msra.mxu0 0.0
        %328 = vmatpush.msra.mxu0 0.0
        %329 = vmatpush.msra.mxu0 0.0
        %330 = vmatpush.msra.mxu0 %v311
        %331 = vmatmul.f32.gmra.mxu0 %v308
        %v332 = vpop.f32.mrf.mxu0
        %v333 = vadd.f32 %v300, %v332
        %334 = vdwg.mxu0
        %335 = vmatpush.msra.mxu0 0.0
        %336 = vmatpush.msra.mxu0 0.0
        %337 = vmatpush.msra.mxu0 0.0
        %338 = vmatpush.msra.mxu0 0.0
        %339 = vmatpush.msra.mxu0 0.0
        %340 = vmatpush.msra.mxu0 0.0
        %341 = vmatpush.msra.mxu0 0.0
        %342 = vmatpush.msra.mxu0 0.0
        %343 = vmatpush.msra.mxu0 0.0
        %344 = vmatpush.msra.mxu0 0.0
        %345 = vmatpush.msra.mxu0 0.0
        %346 = vmatpush.msra.mxu0 0.0
        %347 = vmatpush.msra.mxu0 0.0
        %348 = vmatpush.msra.mxu0 0.0
        %349 = vmatpush.msra.mxu0 0.0
        %350 = vmatpush.msra.mxu0 %v313
        %351 = vmatmul.f32.gmra.mxu0 %v308
        %v352 = vpop.f32.mrf.mxu0
        %v353 = vadd.f32 %v300, %v352
        %354 = vdwg.mxu0
        %v355 = vmax.f32 %v333, 0.0
        %v356 = vmax.f32 %v353, 0.0
        %v357 = vmin.f32 %v355, 6.0
        %v358 = vmin.f32 %v356, 6.0
        %s359 = scalar_lea.vmem [#allocation2], 64
        %v360 = vld [vmem:[%s359] sm:$0xff]
        %v361 = vld [vmem:[%s359 + $0x8] sm:$0xff]
        %v362 = vmul.f32 %v357, %v360
        %v363 = vmul.f32 %v358, %v361
        %364 = vrot.lane.b32.xlu0 %v357, 17
        %v365 = vpop.permute.xlu0 %364
        %366 = vrot.lane.b32.xlu0 %v358, 17
        %v367 = vpop.permute.xlu0 %366
        %v368 = vlaneseq
        %v369 = vand.u32 %v368, 127
        %vm370 = vcmp.lt.s32.totalorder %v369, 17
        %v371 = vsel %vm370, %v365, %v367
        %v372 = vsel %vm370, %v367, %v365
        %v373 = vld [vmem:[#allocation2] sm:$0xff]
        %v374 = vld [vmem:[#allocation2 + $0x8] sm:$0xff]
        %v375 = vmul.f32 %v372, %v373
        %v376 = vmul.f32 %v371, %v374
        %v377 = vadd.f32 %v362, %v375
        %v378 = vadd.f32 %v363, %v376
        %379 = vrot.lane.b32.xlu0 %v357, 16
        %v380 = vpop.permute.xlu0 %379
        %381 = vrot.lane.b32.xlu0 %v358, 16
        %v382 = vpop.permute.xlu0 %381
        %vm383 = vcmp.lt.s32.totalorder %v369, 16
        %v384 = vsel %vm383, %v380, %v382
        %v385 = vsel %vm383, %v382, %v380
        %s386 = scalar_lea.vmem [#allocation2], 16
        %v387 = vld [vmem:[%s386] sm:$0xff]
        %v388 = vld [vmem:[%s386 + $0x8] sm:$0xff]
        %v389 = vmul.f32 %v385, %v387
        %v390 = vmul.f32 %v384, %v388
        %v391 = vadd.f32 %v377, %v389
        %v392 = vadd.f32 %v378, %v390
        %393 = vrot.lane.b32.xlu0 %v357, 15
        %v394 = vpop.permute.xlu0 %393
        %395 = vrot.lane.b32.xlu0 %v358, 15
        %v396 = vpop.permute.xlu0 %395
        %vm397 = vcmp.lt.s32.totalorder %v369, 15
        %v398 = vsel %vm397, %v394, %v396
        %v399 = vsel %vm397, %v396, %v394
        %s400 = scalar_lea.vmem [#allocation2], 32
        %v401 = vld [vmem:[%s400] sm:$0xff]
        %v402 = vld [vmem:[%s400 + $0x8] sm:$0xff]
        %v403 = vmul.f32 %v399, %v401
        %v404 = vmul.f32 %v398, %v402
        %v405 = vadd.f32 %v391, %v403
        %v406 = vadd.f32 %v392, %v404
        %407 = vrot.lane.b32.xlu0 %v357, 1
        %v408 = vpop.permute.xlu0 %407
        %409 = vrot.lane.b32.xlu0 %v358, 1
        %v410 = vpop.permute.xlu0 %409
        %vm411 = vcmp.lt.s32.totalorder %v369, 1
        %v412 = vsel %vm411, %v408, %v410
        %v413 = vsel %vm411, %v410, %v408
        %s414 = scalar_lea.vmem [#allocation2], 48
        %v415 = vld [vmem:[%s414] sm:$0xff]
        %v416 = vld [vmem:[%s414 + $0x8] sm:$0xff]
        %v417 = vmul.f32 %v413, %v415
        %v418 = vmul.f32 %v412, %v416
        %v419 = vadd.f32 %v405, %v417
        %v420 = vadd.f32 %v406, %v418
        %421 = vrot.lane.b32.xlu0 %v357, 127
        %v422 = vpop.permute.xlu0 %421
        %423 = vrot.lane.b32.xlu0 %v358, 127
        %v424 = vpop.permute.xlu0 %423
        %vm425 = vcmp.lt.s32.totalorder %v369, 127
        %v426 = vsel %vm425, %v422, %v424
        %v427 = vsel %vm425, %v424, %v422
        %s428 = scalar_lea.vmem [#allocation2], 80
        %v429 = vld [vmem:[%s428] sm:$0xff]
        %v430 = vld [vmem:[%s428 + $0x8] sm:$0xff]
        %v431 = vmul.f32 %v426, %v429
        %v432 = vmul.f32 %v427, %v430
        %v433 = vadd.f32 %v419, %v431
        %v434 = vadd.f32 %v420, %v432
        %435 = vrot.lane.b32.xlu0 %v357, 113
        %v436 = vpop.permute.xlu0 %435
        %437 = vrot.lane.b32.xlu0 %v358, 113
        %v438 = vpop.permute.xlu0 %437
        %vm439 = vcmp.lt.s32.totalorder %v369, 113
        %v440 = vsel %vm439, %v436, %v438
        %v441 = vsel %vm439, %v438, %v436
        %s442 = scalar_lea.vmem [#allocation2], 96
        %v443 = vld [vmem:[%s442] sm:$0xff]
        %v444 = vld [vmem:[%s442 + $0x8] sm:$0xff]
        %v445 = vmul.f32 %v440, %v443
        %v446 = vmul.f32 %v441, %v444
        %v447 = vadd.f32 %v433, %v445
        %v448 = vadd.f32 %v434, %v446
        %449 = vrot.lane.b32.xlu0 %v357, 112
        %v450 = vpop.permute.xlu0 %449
        %451 = vrot.lane.b32.xlu0 %v358, 112
        %v452 = vpop.permute.xlu0 %451
        %vm453 = vcmp.lt.s32.totalorder %v369, 112
        %v454 = vsel %vm453, %v450, %v452
        %v455 = vsel %vm453, %v452, %v450
        %s456 = scalar_lea.vmem [#allocation2], 112
        %v457 = vld [vmem:[%s456] sm:$0xff]
        %v458 = vld [vmem:[%s456 + $0x8] sm:$0xff]
        %v459 = vmul.f32 %v454, %v457
        %v460 = vmul.f32 %v455, %v458
        %v461 = vadd.f32 %v447, %v459
        %v462 = vadd.f32 %v448, %v460
        %463 = vrot.lane.b32.xlu0 %v357, 111
        %v464 = vpop.permute.xlu0 %463
        %465 = vrot.lane.b32.xlu0 %v358, 111
        %v466 = vpop.permute.xlu0 %465
        %vm467 = vcmp.lt.s32.totalorder %v369, 111
        %v468 = vsel %vm467, %v464, %v466
        %v469 = vsel %vm467, %v466, %v464
        %s470 = scalar_lea.vmem [#allocation2], 128
        %v471 = vld [vmem:[%s470] sm:$0xff]
        %v472 = vld [vmem:[%s470 + $0x8] sm:$0xff]
        %v473 = vmul.f32 %v468, %v471
        %v474 = vmul.f32 %v469, %v472
        %v475 = vadd.f32 %v461, %v473
        %v476 = vadd.f32 %v462, %v474
        %v477 = vld [vmem:[%s4] sm:$0xff]
        %479 = vset.pattern.permute.xlu0 0
        %480 = vperm.xlu0 %479, %v477
        %v481 = vpop.permute.xlu0 %480
        %v483 = vadd.f32 %v475, %v481
        %v484 = vadd.f32 %v476, %v481
        %v485 = vmax.f32 %v483, 0.0
        %v486 = vmax.f32 %v484, 0.0
        %v487 = vmin.f32 %v485, 6.0
        %v488 = vmin.f32 %v486, 6.0
        %v489 = vld [vmem:[%s5] sm:$0xf]
        %v490 = vld [vmem:[%s6] sm:$0xf]
        %492 = vset.pattern.permute.xlu0 0
        %493 = vperm.xlu0 %492, %v490
        %v494 = vpop.permute.xlu0 %493
        %vm496 = vcmask 64512
        %v498 = vsel %vm496, %v489, 0
        %500 = vmatpush.msra.mxu0 0.0
        %501 = vmatpush.msra.mxu0 0.0
        %502 = vmatpush.msra.mxu0 0.0
        %503 = vmatpush.msra.mxu0 0.0
        %504 = vmatpush.msra.mxu0 0.0
        %505 = vmatpush.msra.mxu0 0.0
        %506 = vmatpush.msra.mxu0 0.0
        %507 = vmatpush.msra.mxu0 0.0
        %508 = vmatpush.msra.mxu0 0.0
        %509 = vmatpush.msra.mxu0 0.0
        %510 = vmatpush.msra.mxu0 0.0
        %511 = vmatpush.msra.mxu0 0.0
        %512 = vmatpush.msra.mxu0 0.0
        %513 = vmatpush.msra.mxu0 0.0
        %514 = vmatpush.msra.mxu0 0.0
        %515 = vmatpush.msra.mxu0 %v487
        %516 = vmatmul.f32.gmra.mxu0 %v498
        %v517 = vpop.f32.mrf.mxu0
        %v518 = vadd.f32 %v494, %v517
        %519 = vdwg.mxu0
        %520 = vmatpush.msra.mxu0 0.0
        %521 = vmatpush.msra.mxu0 0.0
        %522 = vmatpush.msra.mxu0 0.0
        %523 = vmatpush.msra.mxu0 0.0
        %524 = vmatpush.msra.mxu0 0.0
        %525 = vmatpush.msra.mxu0 0.0
        %526 = vmatpush.msra.mxu0 0.0
        %527 = vmatpush.msra.mxu0 0.0
        %528 = vmatpush.msra.mxu0 0.0
        %529 = vmatpush.msra.mxu0 0.0
        %530 = vmatpush.msra.mxu0 0.0
        %531 = vmatpush.msra.mxu0 0.0
        %532 = vmatpush.msra.mxu0 0.0
        %533 = vmatpush.msra.mxu0 0.0
        %534 = vmatpush.msra.mxu0 0.0
        %535 = vmatpush.msra.mxu0 %v488
        %536 = vmatmul.f32.gmra.mxu0 %v498
        %v537 = vpop.f32.mrf.mxu0
        %v538 = vadd.f32 %v494, %v537
        %539 = vdwg.mxu0
        %540 = vst [vmem:[#allocation1] ss:$2 sm:$0xff] %v294
        %v541 = vld.sshfl [vmem:[#allocation1] sm:$0xff pattern:$0x75316420]
        %v542 = vld.sshfl [vmem:[#allocation1 + $0x8] sm:$0xff pattern:$0x75316420]
        %v545 = vadd.f32 %v518, %v541
        %v546 = vadd.f32 %v538, %v542
        %v549 = vrot.slane %v546, 4
        %v550 = vsel %vm310, %v545, %v549
        %552 = vst [vmem:[%s288] sm:$0xff] %v550
        %s553 = sand.u32 %s182, 1
        %s554 = scalar_lea.sflag [#allocation4], %s553
        %s555 = sand.u32 %s182, 1
        %s556 = smul.addr %s555, 8
        %s557 = scalar_lea.vmem [#allocation5], %s556
        // Predicated region
        $region53: #{tpu_custom_call.1} parent=47 // pred_check
          %p558 = pneg %p192
        $region54: #{tpu_custom_call.1} parent=47 // pred_check_branch
          %560 = sbr.rel (%p558) target = $region56
        $region55: #{tpu_custom_call.1} parent=47 // pred_region
          %562 = vsyncadd %s554, 0
          %s563 = smul.addr %s22, 2
          %s564 = smul.addr %s563, 4
          %s565 = scalar_lea.hbm %s7, %s564
          %s567 = sshll.u32 %s557, 4
          %s568 = int_to_ptr.vmem [resolvable:$true] %s567
          %s569 = sshll.u32 %s565, 4
          %s570 = int_to_ptr.hbm [resolvable:$true] %s569
          %572 = dma.vmem_to_hbm [thread:$0]  %s568, 128, %s570, %s554
        $region56: #{tpu_custom_call.1} parent=47 // pred_fallthru
          _
      $region48: #{tpu_custom_call.1} parent=5 // pred_fallthru
        _
      %p573 = scmp.le.s32.totalorder 2, %s17
      // Predicated region
      $region57: #{tpu_custom_call.1} parent=5 // pred_check
        %p574 = pneg %p573
      $region58: #{tpu_custom_call.1} parent=5 // pred_check_branch
        %576 = sbr.rel (%p574) target = $region60
      $region59: #{tpu_custom_call.1} parent=5 // pred_region
        %s577 = ssub.s32 %s17, 2
        // Predicated region
        $region61: #{tpu_custom_call.1} parent=59 // pred_check
          %p578 = pneg %p198
        $region62: #{tpu_custom_call.1} parent=59 // pred_check_branch
          %580 = sbr.rel (%p578) target = $region64
        $region63: #{tpu_custom_call.1} parent=59 // pred_region
          %s581 = sand.u32 %s183, 1
          %s582 = scalar_lea.sflag [#allocation4], %s581
          %s583 = sand.u32 %s183, 1
          %s584 = smul.addr %s583, 8
          %s585 = scalar_lea.vmem [#allocation5], %s584
          %587 = dma.done %s582, 128
        $region64: #{tpu_custom_call.1} parent=59 // pred_fallthru
          _
      $region60: #{tpu_custom_call.1} parent=5 // pred_fallthru
        _
    $region6: #{tpu_custom_call.1} parent=1 // loop_footer
      %s21 = sadd.s32 1, %s17
    $region7: #{tpu_custom_call.1} parent=1 // loop_footer_branch
      %16 = sbr.rel target = $region3
    $region8: #{tpu_custom_call.1} parent=1 // loop_exit
      _
    %588 = vsyncpa [#allocation3], 1
    %s589 = scalar_lea.sflag [#allocation3], 1
    %590 = vsyncpa %s589, 1
    %591 = vsyncpa [#allocation4], 1
    %s592 = scalar_lea.sflag [#allocation4], 1
    %593 = vsyncpa %s592, 1

</llo_original>
